<compile_context>
chip_gen: v5e
topology: v5e:2x2
jax: 0.10.0
libtpu: 0.0.40
codegen_flags: <defaults>
</compile_context>

<pallas_src>
import functools

import jax
import jax.numpy as jnp
from jax.experimental import pallas as pl
from jax.experimental.pallas import tpu as pltpu

INPUT_DIM = 32
HIDDEN_DIMS = [128, 64, 32, 16]
OUT_DIM = 5

LANE = 128      # lane width (last dim)
SUBLANE = 8     # sublane width (second-to-last dim)


def _round_up(n, m):
    return ((n + m - 1) // m) * m


def _mlp_kernel(x_ref, w_ref, b_ref, o_ref, *, num_layers, input_dim):
    """Fused forward for one (TM, input_dim) batch tile.

    x_ref: (TM, input_dim)      unpadded activation tile (f32)
    w_ref: (NL, PAD, PAD)       all weights, zero-padded, VMEM-resident (bf16/f32)
    b_ref: (NL, PAD)            all biases, zero-padded, f32, VMEM-resident
    o_ref: (TM, PAD)            lane-dense output tile (first OUT_DIM cols real)
    """
    h = x_ref[...]                                       # (TM, input_dim) f32
    for i in range(num_layers):
        if i == 0:
            # First layer runs with K = input_dim (no lane-padding of x needed);
            # static sublane slice (input_dim is a multiple of 8).
            w = w_ref[0, :input_dim, :]                  # (input_dim, PAD)
        else:
            w = w_ref[i]                                 # (PAD, PAD), static index
        z = jnp.dot(h.astype(w.dtype), w, preferred_element_type=jnp.float32)
        z = z + b_ref[i:i + 1, :]                        # (TM,PAD)+(1,PAD), f32
        if i < num_layers - 1:
            z = jnp.maximum(z, 0.0)                      # ReLU; dropout = identity (eval)
        h = z
    o_ref[...] = h                                       # unmasked, lane-dense store


def _pack_params(params, pad_dim, weight_dtype):
    """Pack per-layer (W, b) into one zero-padded weight slab + one bias slab."""
    nl = len(params)
    w_slab = jnp.zeros((nl, pad_dim, pad_dim), weight_dtype)
    b_slab = jnp.zeros((nl, pad_dim), jnp.float32)
    for i, (w, b) in enumerate(params):
        fi, fo = w.shape
        w_slab = w_slab.at[i, :fi, :fo].set(w.astype(weight_dtype))
        b_slab = b_slab.at[i, :fo].set(b.reshape(-1).astype(jnp.float32))
    return w_slab, b_slab


def simple_nn_forward(x, params, *, tile_m=1024, weight_dtype=jnp.bfloat16,
                      return_padded=False):
    """Forward pass of SimpleNN (inference mode: dropout is identity).

    x: (B, input_dim) f32, fed to the kernel unpadded.
    params: list of (W, b) with W shaped (in_dim, out_dim) (transposed vs
            PyTorch nn.Linear.weight), b shaped (out_dim,).
    tile_m: batch-tile upper bound; actual tm adapts so the grid has >= 2 steps.
    weight_dtype: jnp.bfloat16 (default, MXU fast path on all generations) or
                  jnp.float32. Accumulation / bias / ReLU are always f32.
    return_padded: if True, return the (B, 128) lane-dense slab so a downstream
                   consumer can fuse the 5-column slice instead of re-reading HBM.
    """
    B, input_dim = x.shape
    dims = [input_dim] + [w.shape[1] for (w, _) in params]
    out_dim = dims[-1]
    nl = len(params)
    pad_dim = max(_round_up(d, LANE) for d in dims)

    # >= 2 grid steps (v7x has 2 TensorCores); partial last block handled by Pallas.
    tm = min(tile_m, max(SUBLANE, _round_up(pl.cdiv(B, 2), SUBLANE)))
    grid = (pl.cdiv(B, tm),)

    # 2 parameter DMAs (one weight slab, one bias slab) instead of 10 tiny ones.
    w_slab, b_slab = _pack_params(params, pad_dim, weight_dtype)

    kernel = functools.partial(_mlp_kernel, num_layers=nl, input_dim=input_dim)

    cost = pl.CostEstimate(
        flops=2 * B * pad_dim * pad_dim * nl,
        transcendentals=0,
        bytes_accessed=(4 * (x.size + B * pad_dim + b_slab.size)
                        + w_slab.size * w_slab.dtype.itemsize),
    )

    out_p = pl.pallas_call(
        kernel,
        out_shape=jax.ShapeDtypeStruct((B, pad_dim), jnp.float32),
        grid=grid,
        in_specs=[
            # Activations: tiled over the batch grid, unpadded (last block dim ==
            # full array dim), double-buffered DMA.
            pl.BlockSpec((tm, input_dim), lambda i: (i, 0)),
            # Weights / biases: constant block index -> fetched once, VMEM-resident,
            # single-buffered (no wasted second slab copy).
            pl.BlockSpec((nl, pad_dim, pad_dim), lambda i: (0, 0, 0),
                         pipeline_mode=pl.Buffered(1)),
            pl.BlockSpec((nl, pad_dim), lambda i: (0, 0),
                         pipeline_mode=pl.Buffered(1)),
        ],
        out_specs=pl.BlockSpec((tm, pad_dim), lambda i: (i, 0)),
        compiler_params=pltpu.CompilerParams(
            dimension_semantics=("parallel",)),
        cost_estimate=cost,
    )(x, w_slab, b_slab)

    if return_padded:
        return out_p
    # Padded weight cols / biases / ReLU keep lanes >= out_dim exactly 0, so this
    # slice is exact.
    return out_p[:B, :out_dim]


def init_params(key, input_dim, hidden_dims, out_dim):
    """Deterministic init mimicking nn.Linear (uniform +-1/sqrt(fan_in))."""
    dims = [input_dim] + list(hidden_dims) + [out_dim]
    params = []
    for i in range(len(dims) - 1):
        fan_in, fan_out = dims[i], dims[i + 1]
        key, kw, kb = jax.random.split(key, 3)
        bound = 1.0 / (fan_in ** 0.5)
        w = jax.random.uniform(kw, (fan_in, fan_out), jnp.float32, -bound, bound)
        b = jax.random.uniform(kb, (fan_out,), jnp.float32, -bound, bound)
        params.append((w, b))
    return params


def reference_forward(x, params, matmul_dtype=jnp.float32):
    h = x
    for i, (w, b) in enumerate(params):
        h = jnp.dot(h.astype(matmul_dtype), w.astype(matmul_dtype),
                    preferred_element_type=jnp.float32) + b
        if i < len(params) - 1:
            h = jnp.maximum(h, 0.0)
    return h


if __name__ == "__main__":
    key = jax.random.PRNGKey(0)
    key, kx = jax.random.split(key)

    BATCH = 64  # small; tm = 32 -> a 2-step batch grid (feeds both v7x TCs)
    x = jax.random.normal(kx, (BATCH, INPUT_DIM), jnp.float32)
    params = init_params(key, INPUT_DIM, HIDDEN_DIMS, OUT_DIM)

    out = jax.block_until_ready(simple_nn_forward(x, params))
    assert out.shape == (BATCH, OUT_DIM)

    # Tight check against a reference using the same bf16-operand / f32-accum math.
    ref_bf16 = reference_forward(x, params, matmul_dtype=jnp.bfloat16)
    err_bf16 = float(jnp.max(jnp.abs(out - ref_bf16)))
    assert jnp.allclose(out, ref_bf16, atol=2e-3, rtol=2e-3), err_bf16

    # Loose sanity check against the full-f32 reference (bf16 operands => looser).
    ref_f32 = reference_forward(x, params, matmul_dtype=jnp.float32)
    err_f32 = float(jnp.max(jnp.abs(out - ref_f32)))
    assert jnp.allclose(out, ref_f32, atol=5e-2, rtol=5e-2), err_f32

    print("KERNEL_OK")
</pallas_src>

<mosaic_0001>
module attributes {stable_mosaic.version = 11 : i64} {
  func.func @_mlp_kernel(%arg0: i32, %arg1: memref<32x32xf32, #tpu.memory_space<vmem>>, %arg2: memref<5x128x128xbf16, #tpu.memory_space<vmem>>, %arg3: memref<5x128xf32, #tpu.memory_space<vmem>>, %arg4: memref<32x128xf32, #tpu.memory_space<vmem>>) attributes {dimension_semantics = [#tpu.dimension_semantics<parallel>], iteration_bounds = array<i64: 2>, scalar_prefetch = 0 : i64, scratch_operands = 0 : i64, tpu.core_type = #tpu.core_type<tc>, window_params = [{transform_indices = @transform_0, window_bounds = array<i64: 32, 32>}, {pipeline_mode = #tpu.pipeline_mode<synchronous>, transform_indices = @transform_1, window_bounds = array<i64: 5, 128, 128>}, {pipeline_mode = #tpu.pipeline_mode<synchronous>, transform_indices = @transform_2, window_bounds = array<i64: 5, 128>}, {transform_indices = @transform_3, window_bounds = array<i64: 32, 128>}]} {
    %c0 = arith.constant 0 : index
    %c0_0 = arith.constant 0 : index
    %0 = vector.load %arg1[%c0, %c0_0] : memref<32x32xf32, #tpu.memory_space<vmem>>, vector<32x32xf32>
    %c0_1 = arith.constant 0 : index
    %c0_2 = arith.constant 0 : index
    %c0_3 = arith.constant 0 : index
    %1 = vector.load %arg2[%c0_1, %c0_2, %c0_3] : memref<5x128x128xbf16, #tpu.memory_space<vmem>>, vector<1x32x128xbf16>
    %2 = vector.shape_cast %1 : vector<1x32x128xbf16> to vector<32x128xbf16>
    %3 = arith.truncf %0 : vector<32x32xf32> to vector<32x32xbf16>
    %cst = arith.constant dense<0.000000e+00> : vector<32x128xf32>
    %4 = tpu.matmul %3, %2, %cst {dimension_numbers = #tpu.dot_dimension_numbers<[1], [0], [0], [1], [0, 0, 1, 1], [], []>} : vector<32x32xbf16>, vector<32x128xbf16>, vector<32x128xf32> -> vector<32x128xf32>
    %c0_4 = arith.constant 0 : index
    %c0_5 = arith.constant 0 : index
    %5 = vector.load %arg3[%c0_4, %c0_5] : memref<5x128xf32, #tpu.memory_space<vmem>>, vector<1x128xf32>
    %6 = vector.broadcast %5 : vector<1x128xf32> to vector<32x128xf32>
    %7 = arith.addf %4, %6 : vector<32x128xf32>
    %cst_6 = arith.constant 0.000000e+00 : f32
    %8 = vector.broadcast %cst_6 : f32 to vector<32x128xf32>
    %9 = arith.maximumf %7, %8 : vector<32x128xf32>
    %c1 = arith.constant 1 : index
    %c0_7 = arith.constant 0 : index
    %c0_8 = arith.constant 0 : index
    %10 = vector.load %arg2[%c1, %c0_7, %c0_8] : memref<5x128x128xbf16, #tpu.memory_space<vmem>>, vector<1x128x128xbf16>
    %11 = vector.shape_cast %10 : vector<1x128x128xbf16> to vector<128x128xbf16>
    %12 = arith.truncf %9 : vector<32x128xf32> to vector<32x128xbf16>
    %cst_9 = arith.constant dense<0.000000e+00> : vector<32x128xf32>
    %13 = tpu.matmul %12, %11, %cst_9 {dimension_numbers = #tpu.dot_dimension_numbers<[1], [0], [0], [1], [0, 0, 1, 1], [], []>} : vector<32x128xbf16>, vector<128x128xbf16>, vector<32x128xf32> -> vector<32x128xf32>
    %c1_10 = arith.constant 1 : index
    %c0_11 = arith.constant 0 : index
    %14 = vector.load %arg3[%c1_10, %c0_11] : memref<5x128xf32, #tpu.memory_space<vmem>>, vector<1x128xf32>
    %15 = vector.broadcast %14 : vector<1x128xf32> to vector<32x128xf32>
    %16 = arith.addf %13, %15 : vector<32x128xf32>
    %cst_12 = arith.constant 0.000000e+00 : f32
    %17 = vector.broadcast %cst_12 : f32 to vector<32x128xf32>
    %18 = arith.maximumf %16, %17 : vector<32x128xf32>
    %c2 = arith.constant 2 : index
    %c0_13 = arith.constant 0 : index
    %c0_14 = arith.constant 0 : index
    %19 = vector.load %arg2[%c2, %c0_13, %c0_14] : memref<5x128x128xbf16, #tpu.memory_space<vmem>>, vector<1x128x128xbf16>
    %20 = vector.shape_cast %19 : vector<1x128x128xbf16> to vector<128x128xbf16>
    %21 = arith.truncf %18 : vector<32x128xf32> to vector<32x128xbf16>
    %cst_15 = arith.constant dense<0.000000e+00> : vector<32x128xf32>
    %22 = tpu.matmul %21, %20, %cst_15 {dimension_numbers = #tpu.dot_dimension_numbers<[1], [0], [0], [1], [0, 0, 1, 1], [], []>} : vector<32x128xbf16>, vector<128x128xbf16>, vector<32x128xf32> -> vector<32x128xf32>
    %c2_16 = arith.constant 2 : index
    %c0_17 = arith.constant 0 : index
    %23 = vector.load %arg3[%c2_16, %c0_17] : memref<5x128xf32, #tpu.memory_space<vmem>>, vector<1x128xf32>
    %24 = vector.broadcast %23 : vector<1x128xf32> to vector<32x128xf32>
    %25 = arith.addf %22, %24 : vector<32x128xf32>
    %cst_18 = arith.constant 0.000000e+00 : f32
    %26 = vector.broadcast %cst_18 : f32 to vector<32x128xf32>
    %27 = arith.maximumf %25, %26 : vector<32x128xf32>
    %c3 = arith.constant 3 : index
    %c0_19 = arith.constant 0 : index
    %c0_20 = arith.constant 0 : index
    %28 = vector.load %arg2[%c3, %c0_19, %c0_20] : memref<5x128x128xbf16, #tpu.memory_space<vmem>>, vector<1x128x128xbf16>
    %29 = vector.shape_cast %28 : vector<1x128x128xbf16> to vector<128x128xbf16>
    %30 = arith.truncf %27 : vector<32x128xf32> to vector<32x128xbf16>
    %cst_21 = arith.constant dense<0.000000e+00> : vector<32x128xf32>
    %31 = tpu.matmul %30, %29, %cst_21 {dimension_numbers = #tpu.dot_dimension_numbers<[1], [0], [0], [1], [0, 0, 1, 1], [], []>} : vector<32x128xbf16>, vector<128x128xbf16>, vector<32x128xf32> -> vector<32x128xf32>
    %c3_22 = arith.constant 3 : index
    %c0_23 = arith.constant 0 : index
    %32 = vector.load %arg3[%c3_22, %c0_23] : memref<5x128xf32, #tpu.memory_space<vmem>>, vector<1x128xf32>
    %33 = vector.broadcast %32 : vector<1x128xf32> to vector<32x128xf32>
    %34 = arith.addf %31, %33 : vector<32x128xf32>
    %cst_24 = arith.constant 0.000000e+00 : f32
    %35 = vector.broadcast %cst_24 : f32 to vector<32x128xf32>
    %36 = arith.maximumf %34, %35 : vector<32x128xf32>
    %c4 = arith.constant 4 : index
    %c0_25 = arith.constant 0 : index
    %c0_26 = arith.constant 0 : index
    %37 = vector.load %arg2[%c4, %c0_25, %c0_26] : memref<5x128x128xbf16, #tpu.memory_space<vmem>>, vector<1x128x128xbf16>
    %38 = vector.shape_cast %37 : vector<1x128x128xbf16> to vector<128x128xbf16>
    %39 = arith.truncf %36 : vector<32x128xf32> to vector<32x128xbf16>
    %cst_27 = arith.constant dense<0.000000e+00> : vector<32x128xf32>
    %40 = tpu.matmul %39, %38, %cst_27 {dimension_numbers = #tpu.dot_dimension_numbers<[1], [0], [0], [1], [0, 0, 1, 1], [], []>} : vector<32x128xbf16>, vector<128x128xbf16>, vector<32x128xf32> -> vector<32x128xf32>
    %c4_28 = arith.constant 4 : index
    %c0_29 = arith.constant 0 : index
    %41 = vector.load %arg3[%c4_28, %c0_29] : memref<5x128xf32, #tpu.memory_space<vmem>>, vector<1x128xf32>
    %42 = vector.broadcast %41 : vector<1x128xf32> to vector<32x128xf32>
    %43 = arith.addf %40, %42 : vector<32x128xf32>
    %c0_30 = arith.constant 0 : index
    %c0_31 = arith.constant 0 : index
    %44 = vector.load %arg4[%c0_30, %c0_31] : memref<32x128xf32, #tpu.memory_space<vmem>>, vector<32x128xf32>
    tpu.vector_store %arg4[%c0_30, %c0_31], %43 {strides = array<i32>} : memref<32x128xf32, #tpu.memory_space<vmem>>, vector<32x128xf32>,
    return
  }
  func.func @transform_0(%arg0: i32) -> (i32, i32) {
    %c0_i32 = arith.constant 0 : i32
    %c0_i32_0 = arith.constant 0 : i32
    return %arg0, %c0_i32 : i32, i32
  }
  func.func @transform_1(%arg0: i32) -> (i32, i32, i32) {
    %c0_i32 = arith.constant 0 : i32
    %c0_i32_0 = arith.constant 0 : i32
    %c0_i32_1 = arith.constant 0 : i32
    %c0_i32_2 = arith.constant 0 : i32
    return %c0_i32, %c0_i32_0, %c0_i32_1 : i32, i32, i32
  }
  func.func @transform_2(%arg0: i32) -> (i32, i32) {
    %c0_i32 = arith.constant 0 : i32
    %c0_i32_0 = arith.constant 0 : i32
    %c0_i32_1 = arith.constant 0 : i32
    return %c0_i32, %c0_i32_0 : i32, i32
  }
  func.func @transform_3(%arg0: i32) -> (i32, i32) {
    %c0_i32 = arith.constant 0 : i32
    %c0_i32_0 = arith.constant 0 : i32
    return %arg0, %c0_i32 : i32, i32
  }
}

</mosaic_0001>

<llo_original>
// kernel: tpu_custom_call.1
$region0: #{tpu_custom_call.1}
  #allocation0 [shape = 'u32[]', space=smem, size = 0x4, offset = 0x4, fixed_abs, tag = 'smem constant byte address 0x4 - core index']
  #allocation1 [shape = 'u32[72,128]{1,0:T(1,128)}', space=vmem, size = 0x9000, scoped, tag = 'internal scratch']
  %s0 = inlined_call_operand.vmem [shape: f32[64,32], index: 0, kind: input, shape index: {}]
  %s1 = inlined_call_operand.hbm [shape: bf16[5,128,128], index: 1, kind: input, shape index: {}]
  %s2 = inlined_call_operand.vmem [shape: f32[5,128], index: 2, kind: input, shape index: {}]
  %s3 = inlined_call_operand.hbm [shape: f32[64,128], index: 3, kind: output, shape index: {}]
  %s4 = sld [smem:[#allocation0]]
  $region49: #{tpu_custom_call.1} parent=0
    _
  %s6 = ssub.s32 1, %s4
  %s7 = scalar_select 0, %s6, %s4
  $region1: #{tpu_custom_call.1} parent=0
    #allocation2 [shape = 'u8[163840]{0}', space=vmem, size = 0x28000, scoped, tag = 'input window, operand 1, single buffered']
    #allocation3 [shape = 's32[2]{0}', space=sflag, size = 0x8, scoped, tag = 'scoped memory for tpu_custom_call.1']
    #allocation4 [shape = 's32[2]{0}', space=sflag, size = 0x8, scoped, tag = 'scoped memory for tpu_custom_call.1']
    #allocation5 [shape = 'u8[32768]{0}', space=vmem, size = 0x8000, scoped, tag = 'output window, operand 0']
    %8 = vsyncpa [#allocation3], 0
    %9 = vsyncpa [#allocation4], 0
    %s10 = scalar_lea.sflag [#allocation4], 1
    %11 = vsyncpa %s10, 0
    loop: start=0, step=1, limit=4
    $region2: #{tpu_custom_call.1} parent=1 // loop_pre_header
      _
    $region3: #{tpu_custom_call.1} parent=1 // loop_header
      %s13 = sphi 0, %s17
      %p14 = scmp.ge.s32.totalorder %s13, 4
      %s23 = sphi 0, %s25
      %s26 = sphi 0, %s23
      %s27 = sphi 0, %s26
      %s43 = sphi 0, %s27
      %s47 = sphi 0, %s47
      %s49 = sphi 0, %s47
      %s50 = sphi 0, %s49
      %s64 = sphi 0, %s50
      %s68 = sphi 0, %s68
      %s70 = sphi 0, %s68
      %s71 = sphi 0, %s70
      %s85 = sphi 0, %s71
      %s91 = sphi 0, %s93
      %s94 = sphi 0, %s91
      %s95 = sphi 0, %s94
      %s111 = sphi 0, %s95
    $region4: #{tpu_custom_call.1} parent=1 // loop_header_branch
      %16 = sbr.rel (%p14) target = $region8
    $region5: #{tpu_custom_call.1} parent=1 // loop_body
      %s18 = ssub.s32 %s13, 1
      %s19 = ssub.s32 %s13, 2
      %s20 = sadd.s32 %s13, 1
      %s21 = ssub.s32 %s13, %s20
      %p22 = scmp.eq.s32.totalorder %s21, 0
      %s24 = sadd.s32 %s23, 1
      %s25 = scalar_select %p22, %s23, %s24
      %p28 = pneg %p22
      %p29 = scmp.eq.s32.totalorder %s13, 1
      %p30 = por %p28, %p29
      %p31 = scmp.ne.s32.totalorder %s23, %s26
      %p32 = scmp.eq.s32.totalorder %s13, 0
      %p33 = por %p31, %p32
      %p34 = scmp.ne.s32.totalorder %s23, %s26
      %p35 = scmp.eq.s32.totalorder %s18, 1
      %p36 = por %p34, %p35
      %p37 = scmp.ne.s32.totalorder %s26, %s27
      %p38 = scmp.eq.s32.totalorder %s18, 0
      %p39 = por %p37, %p38
      %p40 = scmp.ne.s32.totalorder %s26, %s27
      %p41 = scmp.eq.s32.totalorder %s19, 1
      %p42 = por %p40, %p41
      %p44 = scmp.ne.s32.totalorder %s27, %s43
      %p45 = scmp.eq.s32.totalorder %s19, 0
      %p46 = por %p44, %p45
      %s48 = sadd.s32 %s47, 1
      %p51 = scmp.eq.s32.totalorder %s13, 1
      %p52 = scmp.ne.s32.totalorder %s47, %s49
      %p53 = scmp.eq.s32.totalorder %s13, 0
      %p54 = por %p52, %p53
      %p55 = scmp.ne.s32.totalorder %s47, %s49
      %p56 = scmp.eq.s32.totalorder %s18, 1
      %p57 = por %p55, %p56
      %p58 = scmp.ne.s32.totalorder %s49, %s50
      %p59 = scmp.eq.s32.totalorder %s18, 0
      %p60 = por %p58, %p59
      %p61 = scmp.ne.s32.totalorder %s49, %s50
      %p62 = scmp.eq.s32.totalorder %s19, 1
      %p63 = por %p61, %p62
      %p65 = scmp.ne.s32.totalorder %s50, %s64
      %p66 = scmp.eq.s32.totalorder %s19, 0
      %p67 = por %p65, %p66
      %s69 = sadd.s32 %s68, 1
      %p72 = scmp.eq.s32.totalorder %s13, 1
      %p73 = scmp.ne.s32.totalorder %s68, %s70
      %p74 = scmp.eq.s32.totalorder %s13, 0
      %p75 = por %p73, %p74
      %p76 = scmp.ne.s32.totalorder %s68, %s70
      %p77 = scmp.eq.s32.totalorder %s18, 1
      %p78 = por %p76, %p77
      %p79 = scmp.ne.s32.totalorder %s70, %s71
      %p80 = scmp.eq.s32.totalorder %s18, 0
      %p81 = por %p79, %p80
      %p82 = scmp.ne.s32.totalorder %s70, %s71
      %p83 = scmp.eq.s32.totalorder %s19, 1
      %p84 = por %p82, %p83
      %p86 = scmp.ne.s32.totalorder %s71, %s85
      %p87 = scmp.eq.s32.totalorder %s19, 0
      %p88 = por %p86, %p87
      %s89 = ssub.s32 %s13, %s20
      %p90 = scmp.eq.s32.totalorder %s89, 0
      %s92 = sadd.s32 %s91, 1
      %s93 = scalar_select %p90, %s91, %s92
      %p96 = pneg %p90
      %p97 = scmp.eq.s32.totalorder %s13, 1
      %p98 = por %p96, %p97
      %p99 = scmp.ne.s32.totalorder %s91, %s94
      %p100 = scmp.eq.s32.totalorder %s13, 0
      %p101 = por %p99, %p100
      %p102 = scmp.ne.s32.totalorder %s91, %s94
      %p103 = scmp.eq.s32.totalorder %s18, 1
      %p104 = por %p102, %p103
      %p105 = scmp.ne.s32.totalorder %s94, %s95
      %p106 = scmp.eq.s32.totalorder %s18, 0
      %p107 = por %p105, %p106
      %p108 = scmp.ne.s32.totalorder %s94, %s95
      %p109 = scmp.eq.s32.totalorder %s19, 1
      %p110 = por %p108, %p109
      %p112 = scmp.ne.s32.totalorder %s95, %s111
      %p113 = scmp.eq.s32.totalorder %s19, 0
      %p114 = por %p112, %p113
      %p115 = scmp.le.s32.totalorder 1, %s13
      %p116 = scmp.lt.s32.totalorder %s13, 3
      %p117 = pnand %p115, %p116
      %p118 = pneg %p117
      // Predicated region
      $region9: #{tpu_custom_call.1} parent=5 // pred_check
        _
      $region10: #{tpu_custom_call.1} parent=5 // pred_check_branch
        %120 = sbr.rel (%p117) target = $region12
      $region11: #{tpu_custom_call.1} parent=5 // pred_region
        %s121 = ssub.s32 %s13, 1
        // Predicated region
        $region13: #{tpu_custom_call.1} parent=11 // pred_check
          %p122 = pneg %p60
        $region14: #{tpu_custom_call.1} parent=11 // pred_check_branch
          %124 = sbr.rel (%p122) target = $region16
        $region15: #{tpu_custom_call.1} parent=11 // pred_region
          %126 = vsyncadd [#allocation3], 0
          %s127 = sshll.u32 %s1, 4
          %s128 = int_to_ptr.hbm [resolvable:$true] %s127
          %s129 = sshll.u32 [#allocation2], 4
          %s130 = int_to_ptr.vmem [resolvable:$true] %s129
          %135 = dma.hbm_to_vmem [thread:$0]  %s128, 5120, %s130, [#allocation3], 64, 64, 4
        $region16: #{tpu_custom_call.1} parent=11 // pred_fallthru
          _
        // Predicated region
        $region17: #{tpu_custom_call.1} parent=11 // pred_check
          %p136 = pneg %p81
        $region18: #{tpu_custom_call.1} parent=11 // pred_check_branch
          %138 = sbr.rel (%p136) target = $region20
        $region19: #{tpu_custom_call.1} parent=11 // pred_region
          _
        $region20: #{tpu_custom_call.1} parent=11 // pred_fallthru
          _
      $region12: #{tpu_custom_call.1} parent=5 // pred_fallthru
        _
      %p139 = scmp.lt.s32.totalorder %s13, 2
      // Predicated region
      $region21: #{tpu_custom_call.1} parent=5 // pred_check
        %p140 = pneg %p139
      $region22: #{tpu_custom_call.1} parent=5 // pred_check_branch
        %142 = sbr.rel (%p140) target = $region24
      $region23: #{tpu_custom_call.1} parent=5 // pred_region
        // Predicated region
        $region25: #{tpu_custom_call.1} parent=23 // pred_check
          %p143 = pneg %p33
        $region26: #{tpu_custom_call.1} parent=23 // pred_check_branch
          %145 = sbr.rel (%p143) target = $region28
        $region27: #{tpu_custom_call.1} parent=23 // pred_region
          %s146 = smul.u32 4, %s13
          %p147 = scmp.lt.s32.totalorder %s146, 7
          %s148 = scalar_select %p147, %s146, 7
          %s149 = smul.addr %s148, 8
          %s150 = scalar_lea.vmem %s0, %s149
          %s151 = smul.u32 4, %s13
        $region28: #{tpu_custom_call.1} parent=23 // pred_fallthru
          _
      $region24: #{tpu_custom_call.1} parent=5 // pred_fallthru
        _
      %p152 = scmp.le.s32.totalorder 1, %s13
      %p153 = scmp.lt.s32.totalorder %s13, 3
      %p154 = pnand %p152, %p153
      %p155 = pneg %p154
      // Predicated region
      $region29: #{tpu_custom_call.1} parent=5 // pred_check
        _
      $region30: #{tpu_custom_call.1} parent=5 // pred_check_branch
        %157 = sbr.rel (%p154) target = $region32
      $region31: #{tpu_custom_call.1} parent=5 // pred_region
        %s158 = ssub.s32 %s13, 1
        // Predicated region
        $region33: #{tpu_custom_call.1} parent=31 // pred_check
          %p159 = pneg %p60
        $region34: #{tpu_custom_call.1} parent=31 // pred_check_branch
          %161 = sbr.rel (%p159) target = $region36
        $region35: #{tpu_custom_call.1} parent=31 // pred_region
          %163 = dma.done [#allocation3], 5120
        $region36: #{tpu_custom_call.1} parent=31 // pred_fallthru
          _
        %s164 = smul.u32 4, %s18
        %p165 = scmp.lt.s32.totalorder %s164, 7
        %s166 = scalar_select %p165, %s164, 7
        %s167 = smul.addr %s166, 8
        %s168 = scalar_lea.vmem %s0, %s167
        %p169 = pneg %p39
        %p170 = pneg %p36
        %p171 = pneg %p60
        %p172 = pneg %p57
        %p173 = pneg %p81
        %p174 = pneg %p78
        %p175 = pneg %p107
        %p176 = pneg %p104
        %s177 = sand.u32 %s94, 1
        %s178 = scalar_lea.sflag [#allocation4], %s177
        %s179 = sand.u32 %s94, 1
        %s180 = smul.addr %s179, 32
        %s181 = scalar_lea.vmem [#allocation5], %s180
        %s182 = smul.u32 4, %s18
        %p183 = scmp.lt.s32.totalorder %s182, 7
        %s184 = scalar_select %p183, %s182, 7
        %s185 = smul.addr %s184, 8
        %s186 = scalar_lea.vmem %s0, %s185
        %s187 = smul.u32 4, %s18
        %s188 = smul.u32 4, %s18
        %v190 = vld [vmem:[%s186] sm:$0xff]
        %v191 = vld [vmem:[%s186 + $0x8] sm:$0xff]
        %v192 = vld [vmem:[%s186 + $0x10] sm:$0xff]
        %v193 = vld [vmem:[%s186 + $0x18] sm:$0xff]
        %v194 = vld [vmem:[#allocation2] sm:$0xf]
        %v195 = vld [vmem:[#allocation2 + $0x4] sm:$0xf]
        %v196 = vld [vmem:[#allocation2 + $0x8] sm:$0xf]
        %v197 = vld [vmem:[#allocation2 + $0xc] sm:$0xf]
        %v198 = vpack.c.bf16 %v191, %v190
        %v199 = vpack.c.bf16 %v193, %v192
        %v200 = vld [vmem:[%s2] sm:$0x1]
        %v201 = vperm.slane %v200, 0
        %v206 = vunpack.c.l.b16 %v194
        %v207 = vunpack.c.l.b16 %v195
        %v208 = vunpack.c.l.b16 %v196
        %v209 = vunpack.c.l.b16 %v197
        %v210 = vpack.c.b16 %v207, %v206
        %v211 = vpack.c.b16 %v209, %v208
        %vm214 = vcmask 261120
        %v216 = vsel %vm214, %v198, 0
        %v219 = vsel %vm214, %v199, 0
        %221 = vmatpush.bf16.msra.mxu0 0
        %222 = vmatpush.bf16.msra.mxu0 0
        %223 = vmatpush.bf16.msra.mxu0 0
        %224 = vmatpush.bf16.msra.mxu0 0
        %225 = vmatpush.bf16.msra.mxu0 0
        %226 = vmatpush.bf16.msra.mxu0 0
        %227 = vmatpush.bf16.msra.mxu0 %v211
        %228 = vmatpush.bf16.msra.mxu0 %v210
        %229 = vmatmul.bf16.gmra.mxu0 %v216
        %v230 = vpop.f32.mrf.mxu0
        %v231 = vadd.f32 %v201, %v230
        %v232 = vpop.f32.mrf.mxu0
        %v233 = vadd.f32 %v201, %v232
        %234 = vmatmul.bf16.gmra.mxu0 %v219
        %v235 = vpop.f32.mrf.mxu0
        %v236 = vadd.f32 %v201, %v235
        %v237 = vpop.f32.mrf.mxu0
        %v238 = vadd.f32 %v201, %v237
        %239 = vdwg.mxu0
        %v240 = vmax.f32 %v231, 0.0
        %v241 = vmax.f32 %v233, 0.0
        %v242 = vmax.f32 %v236, 0.0
        %v243 = vmax.f32 %v238, 0.0
        %s244 = scalar_lea.vmem [#allocation2], 64
        %v245 = vld [vmem:[%s244] sm:$0xf]
        %v246 = vld [vmem:[%s244 + $0x4] sm:$0xf]
        %v247 = vld [vmem:[%s244 + $0x8] sm:$0xf]
        %v248 = vld [vmem:[%s244 + $0xc] sm:$0xf]
        %v249 = vld [vmem:[%s244 + $0x10] sm:$0xf]
        %v250 = vld [vmem:[%s244 + $0x14] sm:$0xf]
        %v251 = vld [vmem:[%s244 + $0x18] sm:$0xf]
        %v252 = vld [vmem:[%s244 + $0x1c] sm:$0xf]
        %v253 = vld [vmem:[%s244 + $0x20] sm:$0xf]
        %v254 = vld [vmem:[%s244 + $0x24] sm:$0xf]
        %v255 = vld [vmem:[%s244 + $0x28] sm:$0xf]
        %v256 = vld [vmem:[%s244 + $0x2c] sm:$0xf]
        %v257 = vld [vmem:[%s244 + $0x30] sm:$0xf]
        %v258 = vld [vmem:[%s244 + $0x34] sm:$0xf]
        %v259 = vld [vmem:[%s244 + $0x38] sm:$0xf]
        %v260 = vld [vmem:[%s244 + $0x3c] sm:$0xf]
        %v261 = vpack.c.bf16 %v241, %v240
        %v262 = vpack.c.bf16 %v243, %v242
        %v263 = vld [vmem:[%s2 + $0x1] sm:$0x1]
        %v264 = vperm.slane %v263, 0
        %v281 = vunpack.c.l.b16 %v245
        %v282 = vunpack.c.l.b16 %v246
        %v283 = vunpack.c.l.b16 %v247
        %v284 = vunpack.c.l.b16 %v248
        %v285 = vunpack.c.l.b16 %v249
        %v286 = vunpack.c.l.b16 %v250
        %v287 = vunpack.c.l.b16 %v251
        %v288 = vunpack.c.l.b16 %v252
        %v289 = vunpack.c.l.b16 %v253
        %v290 = vunpack.c.l.b16 %v254
        %v291 = vunpack.c.l.b16 %v255
        %v292 = vunpack.c.l.b16 %v256
        %v293 = vunpack.c.l.b16 %v257
        %v294 = vunpack.c.l.b16 %v258
        %v295 = vunpack.c.l.b16 %v259
        %v296 = vunpack.c.l.b16 %v260
        %v297 = vpack.c.b16 %v282, %v281
        %v298 = vpack.c.b16 %v284, %v283
        %v299 = vpack.c.b16 %v286, %v285
        %v300 = vpack.c.b16 %v288, %v287
        %v301 = vpack.c.b16 %v290, %v289
        %v302 = vpack.c.b16 %v292, %v291
        %v303 = vpack.c.b16 %v294, %v293
        %v304 = vpack.c.b16 %v296, %v295
        %313 = vmatpush.bf16.msra.mxu0 %v304
        %314 = vmatpush.bf16.msra.mxu0 %v303
        %315 = vmatpush.bf16.msra.mxu0 %v302
        %316 = vmatpush.bf16.msra.mxu0 %v301
        %317 = vmatpush.bf16.msra.mxu0 %v300
        %318 = vmatpush.bf16.msra.mxu0 %v299
        %319 = vmatpush.bf16.msra.mxu0 %v298
        %320 = vmatpush.bf16.msra.mxu0 %v297
        %321 = vmatmul.bf16.gmra.mxu0 %v261
        %v322 = vpop.f32.mrf.mxu0
        %v323 = vadd.f32 %v264, %v322
        %v324 = vpop.f32.mrf.mxu0
        %v325 = vadd.f32 %v264, %v324
        %326 = vmatmul.bf16.gmra.mxu0 %v262
        %v327 = vpop.f32.mrf.mxu0
        %v328 = vadd.f32 %v264, %v327
        %v329 = vpop.f32.mrf.mxu0
        %v330 = vadd.f32 %v264, %v329
        %331 = vdwg.mxu0
        %v332 = vmax.f32 %v323, 0.0
        %v333 = vmax.f32 %v325, 0.0
        %v334 = vmax.f32 %v328, 0.0
        %v335 = vmax.f32 %v330, 0.0
        %s336 = scalar_lea.vmem [#allocation2], 128
        %v337 = vld [vmem:[%s336] sm:$0xf]
        %v338 = vld [vmem:[%s336 + $0x4] sm:$0xf]
        %v339 = vld [vmem:[%s336 + $0x8] sm:$0xf]
        %v340 = vld [vmem:[%s336 + $0xc] sm:$0xf]
        %v341 = vld [vmem:[%s336 + $0x10] sm:$0xf]
        %v342 = vld [vmem:[%s336 + $0x14] sm:$0xf]
        %v343 = vld [vmem:[%s336 + $0x18] sm:$0xf]
        %v344 = vld [vmem:[%s336 + $0x1c] sm:$0xf]
        %v345 = vld [vmem:[%s336 + $0x20] sm:$0xf]
        %v346 = vld [vmem:[%s336 + $0x24] sm:$0xf]
        %v347 = vld [vmem:[%s336 + $0x28] sm:$0xf]
        %v348 = vld [vmem:[%s336 + $0x2c] sm:$0xf]
        %v349 = vld [vmem:[%s336 + $0x30] sm:$0xf]
        %v350 = vld [vmem:[%s336 + $0x34] sm:$0xf]
        %v351 = vld [vmem:[%s336 + $0x38] sm:$0xf]
        %v352 = vld [vmem:[%s336 + $0x3c] sm:$0xf]
        %v353 = vpack.c.bf16 %v333, %v332
        %v354 = vpack.c.bf16 %v335, %v334
        %v355 = vld [vmem:[%s2 + $0x2] sm:$0x1]
        %v356 = vperm.slane %v355, 0
        %v373 = vunpack.c.l.b16 %v337
        %v374 = vunpack.c.l.b16 %v338
        %v375 = vunpack.c.l.b16 %v339
        %v376 = vunpack.c.l.b16 %v340
        %v377 = vunpack.c.l.b16 %v341
        %v378 = vunpack.c.l.b16 %v342
        %v379 = vunpack.c.l.b16 %v343
        %v380 = vunpack.c.l.b16 %v344
        %v381 = vunpack.c.l.b16 %v345
        %v382 = vunpack.c.l.b16 %v346
        %v383 = vunpack.c.l.b16 %v347
        %v384 = vunpack.c.l.b16 %v348
        %v385 = vunpack.c.l.b16 %v349
        %v386 = vunpack.c.l.b16 %v350
        %v387 = vunpack.c.l.b16 %v351
        %v388 = vunpack.c.l.b16 %v352
        %v389 = vpack.c.b16 %v374, %v373
        %v390 = vpack.c.b16 %v376, %v375
        %v391 = vpack.c.b16 %v378, %v377
        %v392 = vpack.c.b16 %v380, %v379
        %v393 = vpack.c.b16 %v382, %v381
        %v394 = vpack.c.b16 %v384, %v383
        %v395 = vpack.c.b16 %v386, %v385
        %v396 = vpack.c.b16 %v388, %v387
        %405 = vmatpush.bf16.msra.mxu0 %v396
        %406 = vmatpush.bf16.msra.mxu0 %v395
        %407 = vmatpush.bf16.msra.mxu0 %v394
        %408 = vmatpush.bf16.msra.mxu0 %v393
        %409 = vmatpush.bf16.msra.mxu0 %v392
        %410 = vmatpush.bf16.msra.mxu0 %v391
        %411 = vmatpush.bf16.msra.mxu0 %v390
        %412 = vmatpush.bf16.msra.mxu0 %v389
        %413 = vmatmul.bf16.gmra.mxu0 %v353
        %v414 = vpop.f32.mrf.mxu0
        %v415 = vadd.f32 %v356, %v414
        %v416 = vpop.f32.mrf.mxu0
        %v417 = vadd.f32 %v356, %v416
        %418 = vmatmul.bf16.gmra.mxu0 %v354
        %v419 = vpop.f32.mrf.mxu0
        %v420 = vadd.f32 %v356, %v419
        %v421 = vpop.f32.mrf.mxu0
        %v422 = vadd.f32 %v356, %v421
        %423 = vdwg.mxu0
        %v424 = vmax.f32 %v415, 0.0
        %v425 = vmax.f32 %v417, 0.0
        %v426 = vmax.f32 %v420, 0.0
        %v427 = vmax.f32 %v422, 0.0
        %s428 = scalar_lea.vmem [#allocation2], 192
        %v429 = vld [vmem:[%s428] sm:$0xf]
        %v430 = vld [vmem:[%s428 + $0x4] sm:$0xf]
        %v431 = vld [vmem:[%s428 + $0x8] sm:$0xf]
        %v432 = vld [vmem:[%s428 + $0xc] sm:$0xf]
        %v433 = vld [vmem:[%s428 + $0x10] sm:$0xf]
        %v434 = vld [vmem:[%s428 + $0x14] sm:$0xf]
        %v435 = vld [vmem:[%s428 + $0x18] sm:$0xf]
        %v436 = vld [vmem:[%s428 + $0x1c] sm:$0xf]
        %v437 = vld [vmem:[%s428 + $0x20] sm:$0xf]
        %v438 = vld [vmem:[%s428 + $0x24] sm:$0xf]
        %v439 = vld [vmem:[%s428 + $0x28] sm:$0xf]
        %v440 = vld [vmem:[%s428 + $0x2c] sm:$0xf]
        %v441 = vld [vmem:[%s428 + $0x30] sm:$0xf]
        %v442 = vld [vmem:[%s428 + $0x34] sm:$0xf]
        %v443 = vld [vmem:[%s428 + $0x38] sm:$0xf]
        %v444 = vld [vmem:[%s428 + $0x3c] sm:$0xf]
        %v445 = vpack.c.bf16 %v425, %v424
        %v446 = vpack.c.bf16 %v427, %v426
        %v447 = vld [vmem:[%s2 + $0x3] sm:$0x1]
        %v448 = vperm.slane %v447, 0
        %v465 = vunpack.c.l.b16 %v429
        %v466 = vunpack.c.l.b16 %v430
        %v467 = vunpack.c.l.b16 %v431
        %v468 = vunpack.c.l.b16 %v432
        %v469 = vunpack.c.l.b16 %v433
        %v470 = vunpack.c.l.b16 %v434
        %v471 = vunpack.c.l.b16 %v435
        %v472 = vunpack.c.l.b16 %v436
        %v473 = vunpack.c.l.b16 %v437
        %v474 = vunpack.c.l.b16 %v438
        %v475 = vunpack.c.l.b16 %v439
        %v476 = vunpack.c.l.b16 %v440
        %v477 = vunpack.c.l.b16 %v441
        %v478 = vunpack.c.l.b16 %v442
        %v479 = vunpack.c.l.b16 %v443
        %v480 = vunpack.c.l.b16 %v444
        %v481 = vpack.c.b16 %v466, %v465
        %v482 = vpack.c.b16 %v468, %v467
        %v483 = vpack.c.b16 %v470, %v469
        %v484 = vpack.c.b16 %v472, %v471
        %v485 = vpack.c.b16 %v474, %v473
        %v486 = vpack.c.b16 %v476, %v475
        %v487 = vpack.c.b16 %v478, %v477
        %v488 = vpack.c.b16 %v480, %v479
        %497 = vmatpush.bf16.msra.mxu0 %v488
        %498 = vmatpush.bf16.msra.mxu0 %v487
        %499 = vmatpush.bf16.msra.mxu0 %v486
        %500 = vmatpush.bf16.msra.mxu0 %v485
        %501 = vmatpush.bf16.msra.mxu0 %v484
        %502 = vmatpush.bf16.msra.mxu0 %v483
        %503 = vmatpush.bf16.msra.mxu0 %v482
        %504 = vmatpush.bf16.msra.mxu0 %v481
        %505 = vmatmul.bf16.gmra.mxu0 %v445
        %v506 = vpop.f32.mrf.mxu0
        %v507 = vadd.f32 %v448, %v506
        %v508 = vpop.f32.mrf.mxu0
        %v509 = vadd.f32 %v448, %v508
        %510 = vmatmul.bf16.gmra.mxu0 %v446
        %v511 = vpop.f32.mrf.mxu0
        %v512 = vadd.f32 %v448, %v511
        %v513 = vpop.f32.mrf.mxu0
        %v514 = vadd.f32 %v448, %v513
        %515 = vdwg.mxu0
        %v516 = vmax.f32 %v507, 0.0
        %v517 = vmax.f32 %v509, 0.0
        %v518 = vmax.f32 %v512, 0.0
        %v519 = vmax.f32 %v514, 0.0
        %s520 = scalar_lea.vmem [#allocation2], 256
        %v521 = vld [vmem:[%s520] sm:$0xf]
        %v522 = vld [vmem:[%s520 + $0x4] sm:$0xf]
        %v523 = vld [vmem:[%s520 + $0x8] sm:$0xf]
        %v524 = vld [vmem:[%s520 + $0xc] sm:$0xf]
        %v525 = vld [vmem:[%s520 + $0x10] sm:$0xf]
        %v526 = vld [vmem:[%s520 + $0x14] sm:$0xf]
        %v527 = vld [vmem:[%s520 + $0x18] sm:$0xf]
        %v528 = vld [vmem:[%s520 + $0x1c] sm:$0xf]
        %v529 = vld [vmem:[%s520 + $0x20] sm:$0xf]
        %v530 = vld [vmem:[%s520 + $0x24] sm:$0xf]
        %v531 = vld [vmem:[%s520 + $0x28] sm:$0xf]
        %v532 = vld [vmem:[%s520 + $0x2c] sm:$0xf]
        %v533 = vld [vmem:[%s520 + $0x30] sm:$0xf]
        %v534 = vld [vmem:[%s520 + $0x34] sm:$0xf]
        %v535 = vld [vmem:[%s520 + $0x38] sm:$0xf]
        %v536 = vld [vmem:[%s520 + $0x3c] sm:$0xf]
        %v537 = vpack.c.bf16 %v517, %v516
        %v538 = vpack.c.bf16 %v519, %v518
        %v539 = vld [vmem:[%s2 + $0x4] sm:$0x1]
        %v540 = vperm.slane %v539, 0
        %v557 = vunpack.c.l.b16 %v521
        %v558 = vunpack.c.l.b16 %v522
        %v559 = vunpack.c.l.b16 %v523
        %v560 = vunpack.c.l.b16 %v524
        %v561 = vunpack.c.l.b16 %v525
        %v562 = vunpack.c.l.b16 %v526
        %v563 = vunpack.c.l.b16 %v527
        %v564 = vunpack.c.l.b16 %v528
        %v565 = vunpack.c.l.b16 %v529
        %v566 = vunpack.c.l.b16 %v530
        %v567 = vunpack.c.l.b16 %v531
        %v568 = vunpack.c.l.b16 %v532
        %v569 = vunpack.c.l.b16 %v533
        %v570 = vunpack.c.l.b16 %v534
        %v571 = vunpack.c.l.b16 %v535
        %v572 = vunpack.c.l.b16 %v536
        %v573 = vpack.c.b16 %v558, %v557
        %v574 = vpack.c.b16 %v560, %v559
        %v575 = vpack.c.b16 %v562, %v561
        %v576 = vpack.c.b16 %v564, %v563
        %v577 = vpack.c.b16 %v566, %v565
        %v578 = vpack.c.b16 %v568, %v567
        %v579 = vpack.c.b16 %v570, %v569
        %v580 = vpack.c.b16 %v572, %v571
        %589 = vmatpush.bf16.msra.mxu0 %v580
        %590 = vmatpush.bf16.msra.mxu0 %v579
        %591 = vmatpush.bf16.msra.mxu0 %v578
        %592 = vmatpush.bf16.msra.mxu0 %v577
        %593 = vmatpush.bf16.msra.mxu0 %v576
        %594 = vmatpush.bf16.msra.mxu0 %v575
        %595 = vmatpush.bf16.msra.mxu0 %v574
        %596 = vmatpush.bf16.msra.mxu0 %v573
        %597 = vmatmul.bf16.gmra.mxu0 %v537
        %v598 = vpop.f32.mrf.mxu0
        %v599 = vadd.f32 %v540, %v598
        %v600 = vpop.f32.mrf.mxu0
        %v601 = vadd.f32 %v540, %v600
        %602 = vmatmul.bf16.gmra.mxu0 %v538
        %v603 = vpop.f32.mrf.mxu0
        %v604 = vadd.f32 %v540, %v603
        %v605 = vpop.f32.mrf.mxu0
        %v606 = vadd.f32 %v540, %v605
        %607 = vdwg.mxu0
        %608 = vst [vmem:[%s181] sm:$0xff] %v599
        %609 = vst [vmem:[%s181 + $0x8] sm:$0xff] %v601
        %610 = vst [vmem:[%s181 + $0x10] sm:$0xff] %v604
        %611 = vst [vmem:[%s181 + $0x18] sm:$0xff] %v606
        %s612 = sand.u32 %s94, 1
        %s613 = scalar_lea.sflag [#allocation4], %s612
        %s614 = sand.u32 %s94, 1
        %s615 = smul.addr %s614, 32
        %s616 = scalar_lea.vmem [#allocation5], %s615
        // Predicated region
        $region37: #{tpu_custom_call.1} parent=31 // pred_check
          %p617 = pneg %p104
        $region38: #{tpu_custom_call.1} parent=31 // pred_check_branch
          %619 = sbr.rel (%p617) target = $region40
        $region39: #{tpu_custom_call.1} parent=31 // pred_region
          %s620 = smul.u32 4, %s18
          %622 = vsyncadd %s613, 0
          %s623 = smul.addr %s620, 8
          %s624 = scalar_lea.hbm %s3, %s623
          %s625 = sshll.u32 %s616, 4
          %s626 = int_to_ptr.vmem [resolvable:$true] %s625
          %s627 = sshll.u32 %s624, 4
          %s628 = int_to_ptr.hbm [resolvable:$true] %s627
          %633 = dma.vmem_to_hbm [thread:$0]  %s626, 512, %s628, %s613, 128, 128, 8
        $region40: #{tpu_custom_call.1} parent=31 // pred_fallthru
          _
      $region32: #{tpu_custom_call.1} parent=5 // pred_fallthru
        _
      %p634 = scmp.le.s32.totalorder 2, %s13
      // Predicated region
      $region41: #{tpu_custom_call.1} parent=5 // pred_check
        %p635 = pneg %p634
      $region42: #{tpu_custom_call.1} parent=5 // pred_check_branch
        %637 = sbr.rel (%p635) target = $region44
      $region43: #{tpu_custom_call.1} parent=5 // pred_region
        %s638 = ssub.s32 %s13, 2
        // Predicated region
        $region45: #{tpu_custom_call.1} parent=43 // pred_check
          %p639 = pneg %p110
        $region46: #{tpu_custom_call.1} parent=43 // pred_check_branch
          %641 = sbr.rel (%p639) target = $region48
        $region47: #{tpu_custom_call.1} parent=43 // pred_region
          %s642 = sand.u32 %s95, 1
          %s643 = scalar_lea.sflag [#allocation4], %s642
          %s644 = sand.u32 %s95, 1
          %s645 = smul.addr %s644, 32
          %s646 = scalar_lea.vmem [#allocation5], %s645
          %648 = dma.done %s643, 512
        $region48: #{tpu_custom_call.1} parent=43 // pred_fallthru
          _
      $region44: #{tpu_custom_call.1} parent=5 // pred_fallthru
        _
    $region6: #{tpu_custom_call.1} parent=1 // loop_footer
      %s17 = sadd.s32 1, %s13
    $region7: #{tpu_custom_call.1} parent=1 // loop_footer_branch
      %12 = sbr.rel target = $region3
    $region8: #{tpu_custom_call.1} parent=1 // loop_exit
      _
    %649 = vsyncpa [#allocation3], 1
    %s650 = scalar_lea.sflag [#allocation3], 1
    %651 = vsyncpa %s650, 1
    %652 = vsyncpa [#allocation4], 1
    %s653 = scalar_lea.sflag [#allocation4], 1
    %654 = vsyncpa %s653, 1

</llo_original>
